<compile_context>
chip_gen: v6e
topology: v6e:2x2x1
jax: 0.10.0
libtpu: 0.0.40
codegen_flags: <defaults>
</compile_context>

<pallas_src>
import jax
import jax.numpy as jnp
from jax.experimental import pallas as pl
from jax.experimental.pallas import tpu as pltpu


def transition_kernel(x_ref, scale_ref, shift_ref, w_ref, o_ref):
    # x_ref:     (4, T, C)    4 taps of each 2x2 pool window, T pooled pixels
    # scale_ref: (1, C)       folded BN scale = gamma / sqrt(var + eps)
    # shift_ref: (1, C)       folded BN shift = beta - mean * scale
    # w_ref:     (C, Cout)    1x1 conv weight^T with the 0.25 pool factor folded in
    # o_ref:     (T, Cout)
    scale = scale_ref[...]
    shift = shift_ref[...]
    # BN affine + ReLU per window tap, then sum the 4 taps (all VPU work).
    acc = jnp.maximum(x_ref[0] * scale + shift, 0.0)
    for k in range(1, 4):
        acc = acc + jnp.maximum(x_ref[k] * scale + shift, 0.0)
    pooled = acc.astype(w_ref.dtype)                                # (T, C)
    # 1x1 conv (pool average pre-folded into w) as a single MXU matmul.
    z = jnp.dot(pooled, w_ref[...], preferred_element_type=jnp.float32)
    o_ref[...] = z.astype(o_ref.dtype)


def _round_up(x, m):
    return (x + m - 1) // m * m


def transition_layer(x_nchw, gamma, beta, conv_w, eps=1e-5,
                     matmul_dtype=jnp.bfloat16):
    N, Cin, H, W = x_nchw.shape
    Cout = conv_w.shape[0]
    assert H % 2 == 0 and W % 2 == 0, "AvgPool2d(2,2) path assumes even H, W"
    Hp, Wp = H // 2, W // 2
    HpWp = Hp * Wp

    x_f32 = x_nchw.astype(jnp.float32)

    # BatchNorm2d training-mode batch statistics (biased variance), folded to
    # a per-channel affine.  Single pass over x (mean + mean-of-squares).
    mean = jnp.mean(x_f32, axis=(0, 2, 3))
    mean_sq = jnp.mean(jnp.square(x_f32), axis=(0, 2, 3))
    var = jnp.maximum(mean_sq - jnp.square(mean), 0.0)
    inv_std = jax.lax.rsqrt(var + eps)
    scale = gamma.astype(jnp.float32) * inv_std
    shift = beta.astype(jnp.float32) - mean * scale

    # Spatial tile over pooled pixels: multiple of 8 sublanes; cap the f32
    # 4-tap input block at ~4 MiB so double-buffering fits all chip gens.
    max_rows_by_vmem = max(8, ((4 * 1024 * 1024) // (4 * Cin * 4)) // 8 * 8)
    T = min(_round_up(HpWp, 8), 1024, max_rows_by_vmem)
    HpWp_pad = _round_up(HpWp, T)

    # Space-to-depth: NCHW -> (N, 4, Hp*Wp, Cin) with one XLA transpose.
    # Channel dim left unpadded (blocks take the full channel extent).
    x6 = x_f32.reshape(N, Cin, Hp, 2, Wp, 2)
    x4 = jnp.transpose(x6, (0, 3, 5, 2, 4, 1)).reshape(N, 4, HpWp, Cin)
    if HpWp_pad != HpWp:
        x4 = jnp.pad(x4, ((0, 0), (0, 0), (0, HpWp_pad - HpWp), (0, 0)))

    scale_2d = scale.reshape(1, Cin)
    shift_2d = shift.reshape(1, Cin)

    # 1x1 conv weight, transposed to (Cin, Cout); fold the 2x2 average (0.25)
    # into the weight so the kernel skips the per-element pool scaling.
    w = (conv_w.reshape(Cout, Cin).astype(jnp.float32).T * 0.25).astype(matmul_dtype)

    # Explicit VMEM budget (double-buffered x/out blocks + resident weight),
    # clamped well under v7x's 64 MiB physical VMEM to leave DMA headroom.
    x_blk = 4 * T * Cin * 4
    o_blk = T * Cout * 4
    w_bytes = Cin * Cout * jnp.dtype(matmul_dtype).itemsize
    est = 2 * x_blk + 2 * o_blk + w_bytes + 2 * Cin * 4
    vmem_limit = int(min(48 * 1024 * 1024, max(2 * est, 8 * 1024 * 1024)))

    out = pl.pallas_call(
        transition_kernel,
        out_shape=jax.ShapeDtypeStruct((N, HpWp_pad, Cout), jnp.float32),
        grid=(N, HpWp_pad // T),
        in_specs=[
            pl.BlockSpec((None, 4, T, Cin), lambda n, t: (n, 0, t, 0)),
            pl.BlockSpec((1, Cin), lambda n, t: (0, 0)),
            pl.BlockSpec((1, Cin), lambda n, t: (0, 0)),
            pl.BlockSpec((Cin, Cout), lambda n, t: (0, 0)),
        ],
        out_specs=pl.BlockSpec((None, T, Cout), lambda n, t: (n, t, 0)),
        compiler_params=pltpu.CompilerParams(
            dimension_semantics=("parallel", "parallel"),
            vmem_limit_bytes=vmem_limit,
        ),
    )(x4, scale_2d, shift_2d, w)

    # Drop spatial padding, back to NCHW.
    out = out[:, :HpWp, :].reshape(N, Hp, Wp, Cout)
    return jnp.transpose(out, (0, 3, 1, 2)).astype(x_nchw.dtype)


def reference(x_nchw, gamma, beta, conv_w, eps=1e-5):
    """Plain-JAX reference mirroring the PyTorch forward (train-mode BN)."""
    mean = jnp.mean(x_nchw, axis=(0, 2, 3), keepdims=True)
    var = jnp.mean(jnp.square(x_nchw - mean), axis=(0, 2, 3), keepdims=True)
    xn = (x_nchw - mean) / jnp.sqrt(var + eps)
    xn = xn * gamma[None, :, None, None] + beta[None, :, None, None]
    y = jnp.maximum(xn, 0.0)
    w2 = conv_w.reshape(conv_w.shape[0], conv_w.shape[1])
    z = jnp.einsum("nchw,oc->nohw", y, w2)
    n, co, h, w_ = z.shape
    return z.reshape(n, co, h // 2, 2, w_ // 2, 2).mean(axis=(3, 5))


if __name__ == "__main__":
    N, Cin, Cout, H, W = 2, 4, 8, 16, 16
    key = jax.random.PRNGKey(0)
    kx, kg, kb, kw = jax.random.split(key, 4)

    x = jax.random.normal(kx, (N, Cin, H, W), dtype=jnp.float32)       # NCHW input
    gamma = jax.random.normal(kg, (Cin,), dtype=jnp.float32) * 0.1 + 1.0
    beta = jax.random.normal(kb, (Cin,), dtype=jnp.float32) * 0.1
    conv_w = jax.random.normal(kw, (Cout, Cin, 1, 1), dtype=jnp.float32) * 0.2

    ref = reference(x, gamma, beta, conv_w)

    # Production path: bf16 MXU operands, f32 accumulation.
    out = jax.block_until_ready(transition_layer(x, gamma, beta, conv_w))
    assert out.shape == (N, Cout, H // 2, W // 2), out.shape
    assert jnp.allclose(out, ref, atol=5e-2, rtol=5e-2), \
        float(jnp.max(jnp.abs(out - ref)))

    # Structural exactness check with f32 matmul operands.
    out_f32 = jax.block_until_ready(
        transition_layer(x, gamma, beta, conv_w, matmul_dtype=jnp.float32))
    assert float(jnp.max(jnp.abs(out_f32 - ref))) < 1e-4, "mismatch vs reference"

    print("KERNEL_OK")
</pallas_src>

<mosaic_0001>
module attributes {stable_mosaic.version = 11 : i64} {
  func.func @transition_kernel(%arg0: i32, %arg1: i32, %arg2: memref<1x4x64x4xf32, #tpu.memory_space<vmem>>, %arg3: memref<1x4xf32, #tpu.memory_space<vmem>>, %arg4: memref<1x4xf32, #tpu.memory_space<vmem>>, %arg5: memref<4x8xbf16, #tpu.memory_space<vmem>>, %arg6: memref<1x64x8xf32, #tpu.memory_space<vmem>>) attributes {dimension_semantics = [#tpu.dimension_semantics<parallel>, #tpu.dimension_semantics<parallel>], iteration_bounds = array<i64: 2, 1>, scalar_prefetch = 0 : i64, scratch_operands = 0 : i64, tpu.core_type = #tpu.core_type<tc>, window_params = [{transform_indices = @transform_0, window_bounds = array<i64: 1, 4, 64, 4>}, {pipeline_mode = #tpu.pipeline_mode<synchronous>, transform_indices = @transform_1, window_bounds = array<i64: 1, 4>}, {pipeline_mode = #tpu.pipeline_mode<synchronous>, transform_indices = @transform_2, window_bounds = array<i64: 1, 4>}, {pipeline_mode = #tpu.pipeline_mode<synchronous>, transform_indices = @transform_3, window_bounds = array<i64: 4, 8>}, {transform_indices = @transform_4, window_bounds = array<i64: 1, 64, 8>}]} {
    %c0 = arith.constant 0 : index
    %c0_0 = arith.constant 0 : index
    %0 = vector.load %arg3[%c0, %c0_0] : memref<1x4xf32, #tpu.memory_space<vmem>>, vector<1x4xf32>
    %c0_1 = arith.constant 0 : index
    %c0_2 = arith.constant 0 : index
    %1 = vector.load %arg4[%c0_1, %c0_2] : memref<1x4xf32, #tpu.memory_space<vmem>>, vector<1x4xf32>
    %c0_3 = arith.constant 0 : index
    %c0_4 = arith.constant 0 : index
    %c0_5 = arith.constant 0 : index
    %c0_6 = arith.constant 0 : index
    %2 = vector.load %arg2[%c0_3, %c0_4, %c0_5, %c0_6] : memref<1x4x64x4xf32, #tpu.memory_space<vmem>>, vector<1x1x64x4xf32>
    %3 = vector.shape_cast %2 : vector<1x1x64x4xf32> to vector<64x4xf32>
    %4 = vector.broadcast %0 : vector<1x4xf32> to vector<64x4xf32>
    %5 = arith.mulf %3, %4 : vector<64x4xf32>
    %6 = vector.broadcast %1 : vector<1x4xf32> to vector<64x4xf32>
    %7 = arith.addf %5, %6 : vector<64x4xf32>
    %cst = arith.constant 0.000000e+00 : f32
    %8 = vector.broadcast %cst : f32 to vector<64x4xf32>
    %9 = arith.maximumf %7, %8 : vector<64x4xf32>
    %c0_7 = arith.constant 0 : index
    %c1 = arith.constant 1 : index
    %c0_8 = arith.constant 0 : index
    %c0_9 = arith.constant 0 : index
    %10 = vector.load %arg2[%c0_7, %c1, %c0_8, %c0_9] : memref<1x4x64x4xf32, #tpu.memory_space<vmem>>, vector<1x1x64x4xf32>
    %11 = vector.shape_cast %10 : vector<1x1x64x4xf32> to vector<64x4xf32>
    %12 = vector.broadcast %0 : vector<1x4xf32> to vector<64x4xf32>
    %13 = arith.mulf %11, %12 : vector<64x4xf32>
    %14 = vector.broadcast %1 : vector<1x4xf32> to vector<64x4xf32>
    %15 = arith.addf %13, %14 : vector<64x4xf32>
    %cst_10 = arith.constant 0.000000e+00 : f32
    %16 = vector.broadcast %cst_10 : f32 to vector<64x4xf32>
    %17 = arith.maximumf %15, %16 : vector<64x4xf32>
    %18 = arith.addf %9, %17 : vector<64x4xf32>
    %c0_11 = arith.constant 0 : index
    %c2 = arith.constant 2 : index
    %c0_12 = arith.constant 0 : index
    %c0_13 = arith.constant 0 : index
    %19 = vector.load %arg2[%c0_11, %c2, %c0_12, %c0_13] : memref<1x4x64x4xf32, #tpu.memory_space<vmem>>, vector<1x1x64x4xf32>
    %20 = vector.shape_cast %19 : vector<1x1x64x4xf32> to vector<64x4xf32>
    %21 = vector.broadcast %0 : vector<1x4xf32> to vector<64x4xf32>
    %22 = arith.mulf %20, %21 : vector<64x4xf32>
    %23 = vector.broadcast %1 : vector<1x4xf32> to vector<64x4xf32>
    %24 = arith.addf %22, %23 : vector<64x4xf32>
    %cst_14 = arith.constant 0.000000e+00 : f32
    %25 = vector.broadcast %cst_14 : f32 to vector<64x4xf32>
    %26 = arith.maximumf %24, %25 : vector<64x4xf32>
    %27 = arith.addf %18, %26 : vector<64x4xf32>
    %c0_15 = arith.constant 0 : index
    %c3 = arith.constant 3 : index
    %c0_16 = arith.constant 0 : index
    %c0_17 = arith.constant 0 : index
    %28 = vector.load %arg2[%c0_15, %c3, %c0_16, %c0_17] : memref<1x4x64x4xf32, #tpu.memory_space<vmem>>, vector<1x1x64x4xf32>
    %29 = vector.shape_cast %28 : vector<1x1x64x4xf32> to vector<64x4xf32>
    %30 = vector.broadcast %0 : vector<1x4xf32> to vector<64x4xf32>
    %31 = arith.mulf %29, %30 : vector<64x4xf32>
    %32 = vector.broadcast %1 : vector<1x4xf32> to vector<64x4xf32>
    %33 = arith.addf %31, %32 : vector<64x4xf32>
    %cst_18 = arith.constant 0.000000e+00 : f32
    %34 = vector.broadcast %cst_18 : f32 to vector<64x4xf32>
    %35 = arith.maximumf %33, %34 : vector<64x4xf32>
    %36 = arith.addf %27, %35 : vector<64x4xf32>
    %37 = arith.truncf %36 : vector<64x4xf32> to vector<64x4xbf16>
    %c0_19 = arith.constant 0 : index
    %c0_20 = arith.constant 0 : index
    %38 = vector.load %arg5[%c0_19, %c0_20] : memref<4x8xbf16, #tpu.memory_space<vmem>>, vector<4x8xbf16>
    %cst_21 = arith.constant dense<0.000000e+00> : vector<64x8xf32>
    %39 = tpu.matmul %37, %38, %cst_21 {dimension_numbers = #tpu.dot_dimension_numbers<[1], [0], [0], [1], [0, 0, 1, 1], [], []>} : vector<64x4xbf16>, vector<4x8xbf16>, vector<64x8xf32> -> vector<64x8xf32>
    %c0_22 = arith.constant 0 : index
    %c0_23 = arith.constant 0 : index
    %c0_24 = arith.constant 0 : index
    %40 = vector.load %arg6[%c0_22, %c0_23, %c0_24] : memref<1x64x8xf32, #tpu.memory_space<vmem>>, vector<1x64x8xf32>
    %41 = vector.shape_cast %40 : vector<1x64x8xf32> to vector<64x8xf32>
    %42 = vector.shape_cast %39 : vector<64x8xf32> to vector<1x64x8xf32>
    tpu.vector_store %arg6[%c0_22, %c0_23, %c0_24], %42 {strides = array<i32>} : memref<1x64x8xf32, #tpu.memory_space<vmem>>, vector<1x64x8xf32>,
    return
  }
  func.func @transform_0(%arg0: i32, %arg1: i32) -> (i32, i32, i32, i32) {
    %c0_i32 = arith.constant 0 : i32
    %c0_i32_0 = arith.constant 0 : i32
    %c0_i32_1 = arith.constant 0 : i32
    return %arg0, %c0_i32, %arg1, %c0_i32_0 : i32, i32, i32, i32
  }
  func.func @transform_1(%arg0: i32, %arg1: i32) -> (i32, i32) {
    %c0_i32 = arith.constant 0 : i32
    %c0_i32_0 = arith.constant 0 : i32
    %c0_i32_1 = arith.constant 0 : i32
    return %c0_i32, %c0_i32_0 : i32, i32
  }
  func.func @transform_2(%arg0: i32, %arg1: i32) -> (i32, i32) {
    %c0_i32 = arith.constant 0 : i32
    %c0_i32_0 = arith.constant 0 : i32
    %c0_i32_1 = arith.constant 0 : i32
    return %c0_i32, %c0_i32_0 : i32, i32
  }
  func.func @transform_3(%arg0: i32, %arg1: i32) -> (i32, i32) {
    %c0_i32 = arith.constant 0 : i32
    %c0_i32_0 = arith.constant 0 : i32
    %c0_i32_1 = arith.constant 0 : i32
    return %c0_i32, %c0_i32_0 : i32, i32
  }
  func.func @transform_4(%arg0: i32, %arg1: i32) -> (i32, i32, i32) {
    %c0_i32 = arith.constant 0 : i32
    %c0_i32_0 = arith.constant 0 : i32
    return %arg0, %arg1, %c0_i32 : i32, i32, i32
  }
}

</mosaic_0001>

<llo_original>
// kernel: tpu_custom_call.1
$region0: #{tpu_custom_call.1}
  #allocation0 [shape = 'u32[]', space=smem, size = 0x4, offset = 0x4, fixed_abs, tag = 'smem constant byte address 0x4 - core index']
  #allocation1 [shape = 'u32[144,128]{1,0:T(1,128)}', space=vmem, size = 0x12000, scoped, tag = 'internal scratch']
  %s0 = inlined_call_operand.vmem [shape: f32[2,4,64,4], index: 0, kind: input, shape index: {}]
  %s1 = inlined_call_operand.vmem [shape: f32[1,4], index: 1, kind: input, shape index: {}]
  %s2 = inlined_call_operand.vmem [shape: f32[1,4], index: 2, kind: input, shape index: {}]
  %s3 = inlined_call_operand.vmem [shape: bf16[4,8], index: 3, kind: input, shape index: {}]
  %s4 = inlined_call_operand.vmem [shape: f32[2,64,8], index: 4, kind: output, shape index: {}]
  %s5 = sld [smem:[#allocation0]]
  $region49: #{tpu_custom_call.1} parent=0
    _
  %s7 = ssub.s32 1, %s5
  %s8 = scalar_select 0, %s7, %s5
  loop: start=0, step=1, limit=4
  $region2: #{tpu_custom_call.1} parent=0 // loop_pre_header
    _
  $region3: #{tpu_custom_call.1} parent=0 // loop_header
    %s10 = sphi 0, %s14
    %p11 = scmp.ge.s32.totalorder %s10, 4
    %s17 = sphi 0, %s29
    %s18 = sphi 0, %s25
    %s19 = sphi 0, %s17
    %s20 = sphi 0, %s18
    %s21 = sphi 0, %s19
    %s22 = sphi 0, %s20
    %s34 = sphi 0, %s36
    %s37 = sphi 0, %s34
    %s38 = sphi 0, %s37
    %s54 = sphi 0, %s38
    %s58 = sphi 0, %s58
    %s60 = sphi 0, %s58
    %s61 = sphi 0, %s60
    %s75 = sphi 0, %s61
    %s79 = sphi 0, %s79
    %s81 = sphi 0, %s79
    %s82 = sphi 0, %s81
    %s96 = sphi 0, %s82
    %s100 = sphi 0, %s100
    %s102 = sphi 0, %s100
    %s103 = sphi 0, %s102
    %s117 = sphi 0, %s103
    %s125 = sphi 0, %s127
    %s128 = sphi 0, %s125
    %s129 = sphi 0, %s128
    %s145 = sphi 0, %s129
  $region4: #{tpu_custom_call.1} parent=0 // loop_header_branch
    %13 = sbr.rel (%p11) target = $region8
  $region5: #{tpu_custom_call.1} parent=0 // loop_body
    %s15 = ssub.s32 %s10, 1
    %s16 = ssub.s32 %s10, 2
    %s23 = sadd.s32 1, %s18
    %p24 = scmp.ge.s32.totalorder %s23, 1
    %s25 = scalar_select %p24, 0, %s23
    %s26 = sadd.s32 1, %s17
    %s27 = scalar_select %p24, %s26, %s17
    %p28 = scmp.ge.s32.totalorder %s27, 2
    %s29 = scalar_select %p28, 0, %s27
    %s30 = ssub.s32 %s17, %s29
    %s31 = ssub.s32 %s18, %s25
    %s32 = sor.u32 %s30, %s31
    %p33 = scmp.eq.s32.totalorder %s32, 0
    %s35 = sadd.s32 %s34, 1
    %s36 = scalar_select %p33, %s34, %s35
    %p39 = pneg %p33
    %p40 = scmp.eq.s32.totalorder %s10, 1
    %p41 = por %p39, %p40
    %p42 = scmp.ne.s32.totalorder %s34, %s37
    %p43 = scmp.eq.s32.totalorder %s10, 0
    %p44 = por %p42, %p43
    %p45 = scmp.ne.s32.totalorder %s34, %s37
    %p46 = scmp.eq.s32.totalorder %s15, 1
    %p47 = por %p45, %p46
    %p48 = scmp.ne.s32.totalorder %s37, %s38
    %p49 = scmp.eq.s32.totalorder %s15, 0
    %p50 = por %p48, %p49
    %p51 = scmp.ne.s32.totalorder %s37, %s38
    %p52 = scmp.eq.s32.totalorder %s16, 1
    %p53 = por %p51, %p52
    %p55 = scmp.ne.s32.totalorder %s38, %s54
    %p56 = scmp.eq.s32.totalorder %s16, 0
    %p57 = por %p55, %p56
    %s59 = sadd.s32 %s58, 1
    %p62 = scmp.eq.s32.totalorder %s10, 1
    %p63 = scmp.ne.s32.totalorder %s58, %s60
    %p64 = scmp.eq.s32.totalorder %s10, 0
    %p65 = por %p63, %p64
    %p66 = scmp.ne.s32.totalorder %s58, %s60
    %p67 = scmp.eq.s32.totalorder %s15, 1
    %p68 = por %p66, %p67
    %p69 = scmp.ne.s32.totalorder %s60, %s61
    %p70 = scmp.eq.s32.totalorder %s15, 0
    %p71 = por %p69, %p70
    %p72 = scmp.ne.s32.totalorder %s60, %s61
    %p73 = scmp.eq.s32.totalorder %s16, 1
    %p74 = por %p72, %p73
    %p76 = scmp.ne.s32.totalorder %s61, %s75
    %p77 = scmp.eq.s32.totalorder %s16, 0
    %p78 = por %p76, %p77
    %s80 = sadd.s32 %s79, 1
    %p83 = scmp.eq.s32.totalorder %s10, 1
    %p84 = scmp.ne.s32.totalorder %s79, %s81
    %p85 = scmp.eq.s32.totalorder %s10, 0
    %p86 = por %p84, %p85
    %p87 = scmp.ne.s32.totalorder %s79, %s81
    %p88 = scmp.eq.s32.totalorder %s15, 1
    %p89 = por %p87, %p88
    %p90 = scmp.ne.s32.totalorder %s81, %s82
    %p91 = scmp.eq.s32.totalorder %s15, 0
    %p92 = por %p90, %p91
    %p93 = scmp.ne.s32.totalorder %s81, %s82
    %p94 = scmp.eq.s32.totalorder %s16, 1
    %p95 = por %p93, %p94
    %p97 = scmp.ne.s32.totalorder %s82, %s96
    %p98 = scmp.eq.s32.totalorder %s16, 0
    %p99 = por %p97, %p98
    %s101 = sadd.s32 %s100, 1
    %p104 = scmp.eq.s32.totalorder %s10, 1
    %p105 = scmp.ne.s32.totalorder %s100, %s102
    %p106 = scmp.eq.s32.totalorder %s10, 0
    %p107 = por %p105, %p106
    %p108 = scmp.ne.s32.totalorder %s100, %s102
    %p109 = scmp.eq.s32.totalorder %s15, 1
    %p110 = por %p108, %p109
    %p111 = scmp.ne.s32.totalorder %s102, %s103
    %p112 = scmp.eq.s32.totalorder %s15, 0
    %p113 = por %p111, %p112
    %p114 = scmp.ne.s32.totalorder %s102, %s103
    %p115 = scmp.eq.s32.totalorder %s16, 1
    %p116 = por %p114, %p115
    %p118 = scmp.ne.s32.totalorder %s103, %s117
    %p119 = scmp.eq.s32.totalorder %s16, 0
    %p120 = por %p118, %p119
    %s121 = ssub.s32 %s17, %s29
    %s122 = ssub.s32 %s18, %s25
    %s123 = sor.u32 %s121, %s122
    %p124 = scmp.eq.s32.totalorder %s123, 0
    %s126 = sadd.s32 %s125, 1
    %s127 = scalar_select %p124, %s125, %s126
    %p130 = pneg %p124
    %p131 = scmp.eq.s32.totalorder %s10, 1
    %p132 = por %p130, %p131
    %p133 = scmp.ne.s32.totalorder %s125, %s128
    %p134 = scmp.eq.s32.totalorder %s10, 0
    %p135 = por %p133, %p134
    %p136 = scmp.ne.s32.totalorder %s125, %s128
    %p137 = scmp.eq.s32.totalorder %s15, 1
    %p138 = por %p136, %p137
    %p139 = scmp.ne.s32.totalorder %s128, %s129
    %p140 = scmp.eq.s32.totalorder %s15, 0
    %p141 = por %p139, %p140
    %p142 = scmp.ne.s32.totalorder %s128, %s129
    %p143 = scmp.eq.s32.totalorder %s16, 1
    %p144 = por %p142, %p143
    %p146 = scmp.ne.s32.totalorder %s129, %s145
    %p147 = scmp.eq.s32.totalorder %s16, 0
    %p148 = por %p146, %p147
    %p149 = scmp.le.s32.totalorder 1, %s10
    %p150 = scmp.lt.s32.totalorder %s10, 3
    %p151 = pnand %p149, %p150
    %p152 = pneg %p151
    // Predicated region
    $region9: #{tpu_custom_call.1} parent=5 // pred_check
      _
    $region10: #{tpu_custom_call.1} parent=5 // pred_check_branch
      %154 = sbr.rel (%p151) target = $region12
    $region11: #{tpu_custom_call.1} parent=5 // pred_region
      %s155 = ssub.s32 %s10, 1
      // Predicated region
      $region13: #{tpu_custom_call.1} parent=11 // pred_check
        %p156 = pneg %p71
      $region14: #{tpu_custom_call.1} parent=11 // pred_check_branch
        %158 = sbr.rel (%p156) target = $region16
      $region15: #{tpu_custom_call.1} parent=11 // pred_region
        _
      $region16: #{tpu_custom_call.1} parent=11 // pred_fallthru
        _
      // Predicated region
      $region17: #{tpu_custom_call.1} parent=11 // pred_check
        %p159 = pneg %p92
      $region18: #{tpu_custom_call.1} parent=11 // pred_check_branch
        %161 = sbr.rel (%p159) target = $region20
      $region19: #{tpu_custom_call.1} parent=11 // pred_region
        _
      $region20: #{tpu_custom_call.1} parent=11 // pred_fallthru
        _
      // Predicated region
      $region21: #{tpu_custom_call.1} parent=11 // pred_check
        %p162 = pneg %p113
      $region22: #{tpu_custom_call.1} parent=11 // pred_check_branch
        %164 = sbr.rel (%p162) target = $region24
      $region23: #{tpu_custom_call.1} parent=11 // pred_region
        _
      $region24: #{tpu_custom_call.1} parent=11 // pred_fallthru
        _
    $region12: #{tpu_custom_call.1} parent=5 // pred_fallthru
      _
    %p165 = scmp.lt.s32.totalorder %s10, 2
    // Predicated region
    $region25: #{tpu_custom_call.1} parent=5 // pred_check
      %p166 = pneg %p165
    $region26: #{tpu_custom_call.1} parent=5 // pred_check_branch
      %168 = sbr.rel (%p166) target = $region28
    $region27: #{tpu_custom_call.1} parent=5 // pred_region
      // Predicated region
      $region29: #{tpu_custom_call.1} parent=27 // pred_check
        %p169 = pneg %p44
      $region30: #{tpu_custom_call.1} parent=27 // pred_check_branch
        %171 = sbr.rel (%p169) target = $region32
      $region31: #{tpu_custom_call.1} parent=27 // pred_region
        %s172 = smul.u32 8, %s18
        %p173 = scmp.lt.s32.totalorder %s17, 1
        %s174 = scalar_select %p173, %s17, 1
        %p175 = scmp.lt.s32.totalorder %s172, 7
        %s176 = scalar_select %p175, %s172, 7
        %s177 = smul.addr %s174, 32
        %s178 = sadd.s32 %s176, %s177
        %s179 = smul.addr %s178, 8
        %s180 = scalar_lea.vmem %s0, %s179
        %s181 = smul.u32 8, %s18
      $region32: #{tpu_custom_call.1} parent=27 // pred_fallthru
        _
    $region28: #{tpu_custom_call.1} parent=5 // pred_fallthru
      _
    %p182 = scmp.le.s32.totalorder 1, %s10
    %p183 = scmp.lt.s32.totalorder %s10, 3
    %p184 = pnand %p182, %p183
    %p185 = pneg %p184
    // Predicated region
    $region33: #{tpu_custom_call.1} parent=5 // pred_check
      _
    $region34: #{tpu_custom_call.1} parent=5 // pred_check_branch
      %187 = sbr.rel (%p184) target = $region36
    $region35: #{tpu_custom_call.1} parent=5 // pred_region
      %s188 = ssub.s32 %s10, 1
      %s189 = smul.u32 8, %s20
      %p190 = scmp.lt.s32.totalorder %s19, 1
      %s191 = scalar_select %p190, %s19, 1
      %p192 = scmp.lt.s32.totalorder %s189, 7
      %s193 = scalar_select %p192, %s189, 7
      %s194 = smul.addr %s191, 32
      %s195 = sadd.s32 %s193, %s194
      %s196 = smul.addr %s195, 8
      %s197 = scalar_lea.vmem %s0, %s196
      %p198 = pneg %p50
      %p199 = pneg %p47
      %p200 = pneg %p71
      %p201 = pneg %p68
      %p202 = pneg %p92
      %p203 = pneg %p89
      %p204 = pneg %p113
      %p205 = pneg %p110
      %p206 = pneg %p141
      %p207 = pneg %p138
      %s208 = smul.u32 8, %s20
      %p209 = scmp.lt.s32.totalorder %s19, 1
      %s210 = scalar_select %p209, %s19, 1
      %p211 = scmp.lt.s32.totalorder %s208, 7
      %s212 = scalar_select %p211, %s208, 7
      %s213 = smul.addr %s210, 8
      %s214 = sadd.s32 %s212, %s213
      %s215 = smul.addr %s214, 8
      %s216 = scalar_lea.vmem %s4, %s215
      %s217 = smul.u32 8, %s20
      %p218 = scmp.lt.s32.totalorder %s19, 1
      %s219 = scalar_select %p218, %s19, 1
      %p220 = scmp.lt.s32.totalorder %s217, 7
      %s221 = scalar_select %p220, %s217, 7
      %s222 = smul.addr %s219, 32
      %s223 = sadd.s32 %s221, %s222
      %s224 = smul.addr %s223, 8
      %s225 = scalar_lea.vmem %s0, %s224
      %s226 = smul.u32 8, %s20
      %s227 = smul.u32 8, %s20
      %p228 = scmp.lt.s32.totalorder %s19, 1
      %s229 = scalar_select %p228, %s19, 1
      %p230 = scmp.lt.s32.totalorder %s227, 7
      %s231 = scalar_select %p230, %s227, 7
      %s232 = smul.addr %s229, 8
      %s233 = sadd.s32 %s231, %s232
      %s234 = smul.addr %s233, 8
      %s235 = scalar_lea.vmem %s4, %s234
      %s236 = smul.u32 8, %s20
      %v238 = vld [vmem:[%s1] sm:$0x1]
      %v239 = vld [vmem:[%s2] sm:$0x1]
      %v240 = vld [vmem:[%s225] sm:$0xff]
      %v241 = vld [vmem:[%s225 + $0x8] sm:$0xff]
      %v242 = vld [vmem:[%s225 + $0x10] sm:$0xff]
      %v243 = vld [vmem:[%s225 + $0x18] sm:$0xff]
      %v244 = vld [vmem:[%s225 + $0x20] sm:$0xff]
      %v245 = vld [vmem:[%s225 + $0x28] sm:$0xff]
      %v246 = vld [vmem:[%s225 + $0x30] sm:$0xff]
      %v247 = vld [vmem:[%s225 + $0x38] sm:$0xff]
      %v249 = vlaneseq
      %v250 = vshrl.u32 %v249, 7
      %v251 = vsub.s32 0, %v250
      %v252 = vrot.slane %v238, %v251
      %v254 = vmul.f32 %v240, %v252
      %v255 = vmul.f32 %v241, %v252
      %v256 = vmul.f32 %v242, %v252
      %v257 = vmul.f32 %v243, %v252
      %v258 = vmul.f32 %v244, %v252
      %v259 = vmul.f32 %v245, %v252
      %v260 = vmul.f32 %v246, %v252
      %v261 = vmul.f32 %v247, %v252
      %v263 = vlaneseq
      %v264 = vshrl.u32 %v263, 7
      %v265 = vsub.s32 0, %v264
      %v266 = vrot.slane %v239, %v265
      %v268 = vadd.f32 %v254, %v266
      %v269 = vadd.f32 %v255, %v266
      %v270 = vadd.f32 %v256, %v266
      %v271 = vadd.f32 %v257, %v266
      %v272 = vadd.f32 %v258, %v266
      %v273 = vadd.f32 %v259, %v266
      %v274 = vadd.f32 %v260, %v266
      %v275 = vadd.f32 %v261, %v266
      %v276 = vmax.f32 %v268, 0.0
      %v277 = vmax.f32 %v269, 0.0
      %v278 = vmax.f32 %v270, 0.0
      %v279 = vmax.f32 %v271, 0.0
      %v280 = vmax.f32 %v272, 0.0
      %v281 = vmax.f32 %v273, 0.0
      %v282 = vmax.f32 %v274, 0.0
      %v283 = vmax.f32 %v275, 0.0
      %s284 = scalar_lea.vmem %s225, 64
      %v285 = vld [vmem:[%s284] sm:$0xff]
      %v286 = vld [vmem:[%s284 + $0x8] sm:$0xff]
      %v287 = vld [vmem:[%s284 + $0x10] sm:$0xff]
      %v288 = vld [vmem:[%s284 + $0x18] sm:$0xff]
      %v289 = vld [vmem:[%s284 + $0x20] sm:$0xff]
      %v290 = vld [vmem:[%s284 + $0x28] sm:$0xff]
      %v291 = vld [vmem:[%s284 + $0x30] sm:$0xff]
      %v292 = vld [vmem:[%s284 + $0x38] sm:$0xff]
      %v293 = vmul.f32 %v285, %v252
      %v294 = vmul.f32 %v286, %v252
      %v295 = vmul.f32 %v287, %v252
      %v296 = vmul.f32 %v288, %v252
      %v297 = vmul.f32 %v289, %v252
      %v298 = vmul.f32 %v290, %v252
      %v299 = vmul.f32 %v291, %v252
      %v300 = vmul.f32 %v292, %v252
      %v301 = vadd.f32 %v293, %v266
      %v302 = vadd.f32 %v294, %v266
      %v303 = vadd.f32 %v295, %v266
      %v304 = vadd.f32 %v296, %v266
      %v305 = vadd.f32 %v297, %v266
      %v306 = vadd.f32 %v298, %v266
      %v307 = vadd.f32 %v299, %v266
      %v308 = vadd.f32 %v300, %v266
      %v309 = vmax.f32 %v301, 0.0
      %v310 = vmax.f32 %v302, 0.0
      %v311 = vmax.f32 %v303, 0.0
      %v312 = vmax.f32 %v304, 0.0
      %v313 = vmax.f32 %v305, 0.0
      %v314 = vmax.f32 %v306, 0.0
      %v315 = vmax.f32 %v307, 0.0
      %v316 = vmax.f32 %v308, 0.0
      %v317 = vadd.f32 %v276, %v309
      %v318 = vadd.f32 %v277, %v310
      %v319 = vadd.f32 %v278, %v311
      %v320 = vadd.f32 %v279, %v312
      %v321 = vadd.f32 %v280, %v313
      %v322 = vadd.f32 %v281, %v314
      %v323 = vadd.f32 %v282, %v315
      %v324 = vadd.f32 %v283, %v316
      %s325 = scalar_lea.vmem %s225, 128
      %v326 = vld [vmem:[%s325] sm:$0xff]
      %v327 = vld [vmem:[%s325 + $0x8] sm:$0xff]
      %v328 = vld [vmem:[%s325 + $0x10] sm:$0xff]
      %v329 = vld [vmem:[%s325 + $0x18] sm:$0xff]
      %v330 = vld [vmem:[%s325 + $0x20] sm:$0xff]
      %v331 = vld [vmem:[%s325 + $0x28] sm:$0xff]
      %v332 = vld [vmem:[%s325 + $0x30] sm:$0xff]
      %v333 = vld [vmem:[%s325 + $0x38] sm:$0xff]
      %v334 = vmul.f32 %v326, %v252
      %v335 = vmul.f32 %v327, %v252
      %v336 = vmul.f32 %v328, %v252
      %v337 = vmul.f32 %v329, %v252
      %v338 = vmul.f32 %v330, %v252
      %v339 = vmul.f32 %v331, %v252
      %v340 = vmul.f32 %v332, %v252
      %v341 = vmul.f32 %v333, %v252
      %v342 = vadd.f32 %v334, %v266
      %v343 = vadd.f32 %v335, %v266
      %v344 = vadd.f32 %v336, %v266
      %v345 = vadd.f32 %v337, %v266
      %v346 = vadd.f32 %v338, %v266
      %v347 = vadd.f32 %v339, %v266
      %v348 = vadd.f32 %v340, %v266
      %v349 = vadd.f32 %v341, %v266
      %v350 = vmax.f32 %v342, 0.0
      %v351 = vmax.f32 %v343, 0.0
      %v352 = vmax.f32 %v344, 0.0
      %v353 = vmax.f32 %v345, 0.0
      %v354 = vmax.f32 %v346, 0.0
      %v355 = vmax.f32 %v347, 0.0
      %v356 = vmax.f32 %v348, 0.0
      %v357 = vmax.f32 %v349, 0.0
      %v358 = vadd.f32 %v317, %v350
      %v359 = vadd.f32 %v318, %v351
      %v360 = vadd.f32 %v319, %v352
      %v361 = vadd.f32 %v320, %v353
      %v362 = vadd.f32 %v321, %v354
      %v363 = vadd.f32 %v322, %v355
      %v364 = vadd.f32 %v323, %v356
      %v365 = vadd.f32 %v324, %v357
      %s366 = scalar_lea.vmem %s225, 192
      %v367 = vld [vmem:[%s366] sm:$0xff]
      %v368 = vld [vmem:[%s366 + $0x8] sm:$0xff]
      %v369 = vld [vmem:[%s366 + $0x10] sm:$0xff]
      %v370 = vld [vmem:[%s366 + $0x18] sm:$0xff]
      %v371 = vld [vmem:[%s366 + $0x20] sm:$0xff]
      %v372 = vld [vmem:[%s366 + $0x28] sm:$0xff]
      %v373 = vld [vmem:[%s366 + $0x30] sm:$0xff]
      %v374 = vld [vmem:[%s366 + $0x38] sm:$0xff]
      %v375 = vmul.f32 %v367, %v252
      %v376 = vmul.f32 %v368, %v252
      %v377 = vmul.f32 %v369, %v252
      %v378 = vmul.f32 %v370, %v252
      %v379 = vmul.f32 %v371, %v252
      %v380 = vmul.f32 %v372, %v252
      %v381 = vmul.f32 %v373, %v252
      %v382 = vmul.f32 %v374, %v252
      %v383 = vadd.f32 %v375, %v266
      %v384 = vadd.f32 %v376, %v266
      %v385 = vadd.f32 %v377, %v266
      %v386 = vadd.f32 %v378, %v266
      %v387 = vadd.f32 %v379, %v266
      %v388 = vadd.f32 %v380, %v266
      %v389 = vadd.f32 %v381, %v266
      %v390 = vadd.f32 %v382, %v266
      %v391 = vmax.f32 %v383, 0.0
      %v392 = vmax.f32 %v384, 0.0
      %v393 = vmax.f32 %v385, 0.0
      %v394 = vmax.f32 %v386, 0.0
      %v395 = vmax.f32 %v387, 0.0
      %v396 = vmax.f32 %v388, 0.0
      %v397 = vmax.f32 %v389, 0.0
      %v398 = vmax.f32 %v390, 0.0
      %v399 = vadd.f32 %v358, %v391
      %v400 = vadd.f32 %v359, %v392
      %v401 = vadd.f32 %v360, %v393
      %v402 = vadd.f32 %v361, %v394
      %v403 = vadd.f32 %v362, %v395
      %v404 = vadd.f32 %v363, %v396
      %v405 = vadd.f32 %v364, %v397
      %v406 = vadd.f32 %v365, %v398
      %v407 = vpack.c.bf16 %v400, %v399
      %v408 = vpack.c.bf16 %v402, %v401
      %v409 = vpack.c.bf16 %v404, %v403
      %v410 = vpack.c.bf16 %v406, %v405
      %v411 = vld [vmem:[%s3] sm:$0x3]
      %vm412 = vcmask 31744
      %v414 = vsel %vm412, %v407, 0
      %v417 = vsel %vm412, %v408, 0
      %v420 = vsel %vm412, %v409, 0
      %v423 = vsel %vm412, %v410, 0
      %vm425 = vcmask 1041408
      %v427 = vsel %vm425, %v411, 0
      %429 = vmatprep.subr.bf16.mxu0 0
      %430 = vmatpush1.bf16.msra.mxu0 0
      %431 = vmatprep.subr.bf16.mxu0 0
      %432 = vmatpush1.bf16.msra.mxu0 0
      %433 = vmatprep.subr.bf16.mxu0 0
      %434 = vmatpush1.bf16.msra.mxu0 0
      %435 = vmatprep.subr.bf16.mxu0 0
      %436 = vmatpush1.bf16.msra.mxu0 0
      %437 = vmatprep.subr.bf16.mxu0 0
      %438 = vmatpush1.bf16.msra.mxu0 0
      %439 = vmatprep.subr.bf16.mxu0 0
      %440 = vmatpush1.bf16.msra.mxu0 0
      %441 = vmatprep.subr.bf16.mxu0 0
      %442 = vmatpush1.bf16.msra.mxu0 0
      %443 = vmatprep.subr.bf16.mxu0 0
      %444 = vmatpush1.bf16.msra.mxu0 %v427
      %445 = vmatprep.subr.bf16.mxu0 0
      %446 = vmatpush2.bf16.msra.mxu0 0
      %447 = vmatprep.subr.bf16.mxu0 0
      %448 = vmatpush2.bf16.msra.mxu0 0
      %449 = vmatprep.subr.bf16.mxu0 0
      %450 = vmatpush2.bf16.msra.mxu0 0
      %451 = vmatprep.subr.bf16.mxu0 0
      %452 = vmatpush2.bf16.msra.mxu0 0
      %453 = vmatprep.subr.bf16.mxu0 0
      %454 = vmatpush2.bf16.msra.mxu0 0
      %455 = vmatprep.subr.bf16.mxu0 0
      %456 = vmatpush2.bf16.msra.mxu0 0
      %457 = vmatprep.subr.bf16.mxu0 0
      %458 = vmatpush2.bf16.msra.mxu0 0
      %459 = vmatprep.subr.bf16.mxu0 0
      %460 = vmatpush2.bf16.msra.mxu0 0
      %461 = vmatprep.mubr.bf16.mxu0 0
      %462 = vmatmul.mubr.bf16.gmra.mxu0 %v414
      %v463 = vpop.f32.mrf.mxu0
      %v464 = vadd.f32 0.0, %v463
      %v465 = vpop.f32.mrf.mxu0
      %v466 = vpop.f32.mrf.mxu0
      %v467 = vadd.f32 0.0, %v466
      %v468 = vpop.f32.mrf.mxu0
      %469 = vmatprep.mubr.bf16.mxu0 0
      %470 = vmatmul.mubr.bf16.gmra.mxu0 %v417
      %v471 = vpop.f32.mrf.mxu0
      %v472 = vadd.f32 0.0, %v471
      %v473 = vpop.f32.mrf.mxu0
      %v474 = vpop.f32.mrf.mxu0
      %v475 = vadd.f32 0.0, %v474
      %v476 = vpop.f32.mrf.mxu0
      %477 = vmatprep.mubr.bf16.mxu0 0
      %478 = vmatmul.mubr.bf16.gmra.mxu0 %v420
      %v479 = vpop.f32.mrf.mxu0
      %v480 = vadd.f32 0.0, %v479
      %v481 = vpop.f32.mrf.mxu0
      %v482 = vpop.f32.mrf.mxu0
      %v483 = vadd.f32 0.0, %v482
      %v484 = vpop.f32.mrf.mxu0
      %485 = vmatprep.mubr.bf16.mxu0 0
      %486 = vmatmul.mubr.bf16.gmra.mxu0 %v423
      %v487 = vpop.f32.mrf.mxu0
      %v488 = vadd.f32 0.0, %v487
      %v489 = vpop.f32.mrf.mxu0
      %v490 = vpop.f32.mrf.mxu0
      %v491 = vadd.f32 0.0, %v490
      %v492 = vpop.f32.mrf.mxu0
      %493 = vdwg.mxu0
      %vm494 = vcmask 64512
      %495 = vst.msk [vmem:[%s235] sm:$0xff] %vm494, %v464
      %496 = vst.msk [vmem:[%s235 + $0x8] sm:$0xff] %vm494, %v467
      %497 = vst.msk [vmem:[%s235 + $0x10] sm:$0xff] %vm494, %v472
      %498 = vst.msk [vmem:[%s235 + $0x18] sm:$0xff] %vm494, %v475
      %499 = vst.msk [vmem:[%s235 + $0x20] sm:$0xff] %vm494, %v480
      %500 = vst.msk [vmem:[%s235 + $0x28] sm:$0xff] %vm494, %v483
      %501 = vst.msk [vmem:[%s235 + $0x30] sm:$0xff] %vm494, %v488
      %502 = vst.msk [vmem:[%s235 + $0x38] sm:$0xff] %vm494, %v491
      %s503 = smul.u32 8, %s20
      %p504 = scmp.lt.s32.totalorder %s19, 1
      %s505 = scalar_select %p504, %s19, 1
      %p506 = scmp.lt.s32.totalorder %s503, 7
      %s507 = scalar_select %p506, %s503, 7
      %s508 = smul.addr %s505, 8
      %s509 = sadd.s32 %s507, %s508
      %s510 = smul.addr %s509, 8
      %s511 = scalar_lea.vmem %s4, %s510
      // Predicated region
      $region37: #{tpu_custom_call.1} parent=35 // pred_check
        %p512 = pneg %p138
      $region38: #{tpu_custom_call.1} parent=35 // pred_check_branch
        %514 = sbr.rel (%p512) target = $region40
      $region39: #{tpu_custom_call.1} parent=35 // pred_region
        %s515 = smul.u32 8, %s20
      $region40: #{tpu_custom_call.1} parent=35 // pred_fallthru
        _
    $region36: #{tpu_custom_call.1} parent=5 // pred_fallthru
      _
    %p516 = scmp.le.s32.totalorder 2, %s10
    // Predicated region
    $region41: #{tpu_custom_call.1} parent=5 // pred_check
      %p517 = pneg %p516
    $region42: #{tpu_custom_call.1} parent=5 // pred_check_branch
      %519 = sbr.rel (%p517) target = $region44
    $region43: #{tpu_custom_call.1} parent=5 // pred_region
      %s520 = ssub.s32 %s10, 2
      // Predicated region
      $region45: #{tpu_custom_call.1} parent=43 // pred_check
        %p521 = pneg %p144
      $region46: #{tpu_custom_call.1} parent=43 // pred_check_branch
        %523 = sbr.rel (%p521) target = $region48
      $region47: #{tpu_custom_call.1} parent=43 // pred_region
        %s524 = smul.u32 8, %s22
        %p525 = scmp.lt.s32.totalorder %s21, 1
        %s526 = scalar_select %p525, %s21, 1
        %p527 = scmp.lt.s32.totalorder %s524, 7
        %s528 = scalar_select %p527, %s524, 7
        %s529 = smul.addr %s526, 8
        %s530 = sadd.s32 %s528, %s529
        %s531 = smul.addr %s530, 8
        %s532 = scalar_lea.vmem %s4, %s531
      $region48: #{tpu_custom_call.1} parent=43 // pred_fallthru
        _
    $region44: #{tpu_custom_call.1} parent=5 // pred_fallthru
      _
  $region6: #{tpu_custom_call.1} parent=0 // loop_footer
    %s14 = sadd.s32 1, %s10
  $region7: #{tpu_custom_call.1} parent=0 // loop_footer_branch
    %9 = sbr.rel target = $region3
  $region8: #{tpu_custom_call.1} parent=0 // loop_exit
    _

</llo_original>
